<compile_context>
chip_gen: v6e
topology: v6e:2x2x1
jax: 0.10.0
libtpu: 0.0.40
codegen_flags: <defaults>
</compile_context>

<pallas_src>
import jax
import jax.numpy as jnp
import numpy as np
from jax import lax
from jax.experimental import pallas as pl
from jax.experimental.pallas import tpu as pltpu

IN_PLANES = 4
OUT_PLANES = 4
STRIDE = 1          # equalInOut identity-shortcut path requires stride=1
EPS = 1e-3          # nn.BatchNorm2d(eps=0.001)
NEG_SLOPE = 0.1     # nn.LeakyReLU(negative_slope=0.1)

_TAPS = [(kh - 1, kw - 1) for kh in range(3) for kw in range(3)]  # (dh, dw), kh outer


def _make_basic_block_kernel(H, W, NHW):
    def kernel(x_ref, s1_ref, h1_ref, w1_ref, h2_ref, w2_ref, b2_ref, m_ref, o_ref):
        x = x_ref[...]                                      # (C, NHW), lane-dense

        # --- BN1 (folded scale/shift) + LeakyReLU(0.1) ----------------------
        a1 = x * s1_ref[...] + h1_ref[...]
        a1 = jnp.maximum(a1, NEG_SLOPE * a1)

        masks = m_ref[...]                                  # (9, NHW) 0/1, precomputed

        def conv3x3(act, w_ref):
            # im2col as a value: 9 XLU lane-rolls, per-tap border mask (skipped
            # for the center tap), concatenated to (9*Cin, NHW), then one MXU
            # matmul (Cout, 9*Cin) @ (9*Cin, NHW) -> lane-dense (Cout, NHW).
            rows = []
            for t, (dh, dw) in enumerate(_TAPS):
                shift = (-(dh * W + dw)) % NHW
                r = act if shift == 0 else pltpu.roll(act, shift=shift, axis=1)
                if (dh, dw) != (0, 0):
                    r = r * masks[t:t + 1, :]
                rows.append(r)
            patch = jnp.concatenate(rows, axis=0)
            return jnp.dot(w_ref[...], patch, preferred_element_type=jnp.float32)

        # conv1 (s2 folded into w1 rows, b1 folded into h2) + LeakyReLU(0.1)
        a2 = conv3x3(a1, w1_ref) + h2_ref[...]
        a2 = jnp.maximum(a2, NEG_SLOPE * a2)

        # conv2 + bias, then identity residual (equalInOut=True)
        o_ref[...] = x + conv3x3(a2, w2_ref) + b2_ref[...]

    return kernel


def basic_block_forward(x_nchw, p):
    N, C, H, W = x_nchw.shape
    Cout = p["w1"].shape[0]
    assert C == Cout and STRIDE == 1, "kernel implements the equalInOut identity path"
    HW = H * W
    NHW = N * HW

    # Fold eval-mode BatchNorm into per-channel scale/shift; fold conv1 bias
    # into the BN2 shift (h2' = be2 - m2*s2 + s2*b1) and BN2 scale s2 into the
    # conv1 weight rows.
    s1 = p["g1"] / jnp.sqrt(p["v1"] + EPS)
    h1 = p["be1"] - p["m1"] * s1
    s2 = p["g2"] / jnp.sqrt(p["v2"] + EPS)
    h2 = p["be2"] - p["m2"] * s2 + s2 * p["b1"]

    # Activations: (C, N*HW) with the whole batch on the lane axis (lane-dense).
    x2 = jnp.transpose(x_nchw, (1, 0, 2, 3)).reshape(C, NHW).astype(jnp.float32)

    # Conv weights OIHW -> (Cout, 9*Cin), columns ordered (kh, kw, cin) to match
    # the im2col row order; s2 folded into w1 rows.
    w1m = jnp.transpose(p["w1"], (0, 2, 3, 1)).reshape(Cout, 9 * C).astype(jnp.float32)
    w1m = s2.astype(jnp.float32)[:, None] * w1m
    w2m = jnp.transpose(p["w2"], (0, 2, 3, 1)).reshape(Cout, 9 * Cout).astype(jnp.float32)

    # Per-image boundary masks for the 9 taps, precomputed on host: a lane is
    # valid for tap (dh, dw) iff its in-image neighbor exists (zero padding).
    lane = np.arange(NHW, dtype=np.int64)
    pos = lane % HW
    row = pos // W
    col = pos % W
    masks = np.stack(
        [((row + dh >= 0) & (row + dh < H) & (col + dw >= 0) & (col + dw < W))
         .astype(np.float32) for (dh, dw) in _TAPS],
        axis=0)                                            # (9, NHW)
    masks = jnp.asarray(masks)

    col2 = lambda v: v.reshape(-1, 1).astype(jnp.float32)

    kernel = _make_basic_block_kernel(H, W, NHW)

    # Single grid step: whole batch processed at once (overhead-bound regime).
    # TODO(synk): for large N, chunk the batch over a grid axis instead.
    out2 = pl.pallas_call(
        kernel,
        out_shape=jax.ShapeDtypeStruct((Cout, NHW), jnp.float32),
        grid_spec=pltpu.PrefetchScalarGridSpec(
            num_scalar_prefetch=0,
            grid=(1,),
            in_specs=[
                pl.BlockSpec((C, NHW), lambda i: (0, 0)),         # x (lane-dense)
                pl.BlockSpec((C, 1), lambda i: (0, 0)),           # bn1 scale
                pl.BlockSpec((C, 1), lambda i: (0, 0)),           # bn1 shift
                pl.BlockSpec((Cout, 9 * C), lambda i: (0, 0)),    # conv1 weights (* s2)
                pl.BlockSpec((Cout, 1), lambda i: (0, 0)),        # bn2 shift (+ s2*b1)
                pl.BlockSpec((Cout, 9 * Cout), lambda i: (0, 0)), # conv2 weights
                pl.BlockSpec((Cout, 1), lambda i: (0, 0)),        # conv2 bias
                pl.BlockSpec((9, NHW), lambda i: (0, 0)),         # precomputed tap masks
            ],
            out_specs=pl.BlockSpec((Cout, NHW), lambda i: (0, 0)),
        ),
        compiler_params=pltpu.CompilerParams(dimension_semantics=("arbitrary",)),
    )(x2, col2(s1), col2(h1), w1m, col2(h2), w2m, col2(p["b2"]), masks)

    return jnp.transpose(out2.reshape(Cout, N, H, W), (1, 0, 2, 3))


def reference_forward(x, p):
    """Pure-JAX (NCHW) reference for the same forward pass."""
    def bn(v, g, b, m, var):
        return (g[None, :, None, None] * (v - m[None, :, None, None])
                / jnp.sqrt(var[None, :, None, None] + EPS)
                + b[None, :, None, None])

    def lrelu(v):
        return jnp.where(v > 0, v, NEG_SLOPE * v)

    out = lrelu(bn(x, p["g1"], p["be1"], p["m1"], p["v1"]))
    out = lax.conv_general_dilated(out, p["w1"], (STRIDE, STRIDE),
                                   ((1, 1), (1, 1)),
                                   dimension_numbers=("NCHW", "OIHW", "NCHW"))
    out = out + p["b1"][None, :, None, None]
    out = lrelu(bn(out, p["g2"], p["be2"], p["m2"], p["v2"]))
    out = lax.conv_general_dilated(out, p["w2"], (1, 1), ((1, 1), (1, 1)),
                                   dimension_numbers=("NCHW", "OIHW", "NCHW"))
    out = out + p["b2"][None, :, None, None]
    return x + out


if __name__ == "__main__":
    key = jax.random.PRNGKey(0)
    ks = jax.random.split(key, 14)

    N, C, H, W = 2, IN_PLANES, 16, 16
    x = jax.random.normal(ks[0], (N, C, H, W), jnp.float32)

    params = {
        # BN1
        "g1": jax.random.uniform(ks[1], (IN_PLANES,), jnp.float32, 0.5, 1.5),
        "be1": 0.1 * jax.random.normal(ks[2], (IN_PLANES,), jnp.float32),
        "m1": 0.1 * jax.random.normal(ks[3], (IN_PLANES,), jnp.float32),
        "v1": jax.random.uniform(ks[4], (IN_PLANES,), jnp.float32, 0.5, 1.5),
        # conv1 (OIHW, like PyTorch)
        "w1": 0.1 * jax.random.normal(ks[5], (OUT_PLANES, IN_PLANES, 3, 3), jnp.float32),
        "b1": 0.1 * jax.random.normal(ks[6], (OUT_PLANES,), jnp.float32),
        # BN2
        "g2": jax.random.uniform(ks[7], (OUT_PLANES,), jnp.float32, 0.5, 1.5),
        "be2": 0.1 * jax.random.normal(ks[8], (OUT_PLANES,), jnp.float32),
        "m2": 0.1 * jax.random.normal(ks[9], (OUT_PLANES,), jnp.float32),
        "v2": jax.random.uniform(ks[10], (OUT_PLANES,), jnp.float32, 0.5, 1.5),
        # conv2 (OIHW)
        "w2": 0.1 * jax.random.normal(ks[11], (OUT_PLANES, OUT_PLANES, 3, 3), jnp.float32),
        "b2": 0.1 * jax.random.normal(ks[12], (OUT_PLANES,), jnp.float32),
    }

    out = basic_block_forward(x, params)
    out = jax.block_until_ready(out)

    ref = reference_forward(x, params)
    np.testing.assert_allclose(np.asarray(out), np.asarray(ref),
                               atol=2e-4, rtol=2e-4)
    print("KERNEL_OK")
</pallas_src>

<mosaic_0001>
module attributes {stable_mosaic.version = 11 : i64} {
  func.func @kernel(%arg0: i32, %arg1: memref<4x512xf32, #tpu.memory_space<vmem>>, %arg2: memref<4x1xf32, #tpu.memory_space<vmem>>, %arg3: memref<4x1xf32, #tpu.memory_space<vmem>>, %arg4: memref<4x36xf32, #tpu.memory_space<vmem>>, %arg5: memref<4x1xf32, #tpu.memory_space<vmem>>, %arg6: memref<4x36xf32, #tpu.memory_space<vmem>>, %arg7: memref<4x1xf32, #tpu.memory_space<vmem>>, %arg8: memref<9x512xf32, #tpu.memory_space<vmem>>, %arg9: memref<4x512xf32, #tpu.memory_space<vmem>>) attributes {dimension_semantics = [#tpu.dimension_semantics<arbitrary>], iteration_bounds = array<i64: 1>, scalar_prefetch = 0 : i64, scratch_operands = 0 : i64, tpu.core_type = #tpu.core_type<tc>, window_params = [{pipeline_mode = #tpu.pipeline_mode<synchronous>, transform_indices = @transform_0, window_bounds = array<i64: 4, 512>}, {pipeline_mode = #tpu.pipeline_mode<synchronous>, transform_indices = @transform_1, window_bounds = array<i64: 4, 1>}, {pipeline_mode = #tpu.pipeline_mode<synchronous>, transform_indices = @transform_2, window_bounds = array<i64: 4, 1>}, {pipeline_mode = #tpu.pipeline_mode<synchronous>, transform_indices = @transform_3, window_bounds = array<i64: 4, 36>}, {pipeline_mode = #tpu.pipeline_mode<synchronous>, transform_indices = @transform_4, window_bounds = array<i64: 4, 1>}, {pipeline_mode = #tpu.pipeline_mode<synchronous>, transform_indices = @transform_5, window_bounds = array<i64: 4, 36>}, {pipeline_mode = #tpu.pipeline_mode<synchronous>, transform_indices = @transform_6, window_bounds = array<i64: 4, 1>}, {pipeline_mode = #tpu.pipeline_mode<synchronous>, transform_indices = @transform_7, window_bounds = array<i64: 9, 512>}, {pipeline_mode = #tpu.pipeline_mode<synchronous>, transform_indices = @transform_8, window_bounds = array<i64: 4, 512>}]} {
    %c0 = arith.constant 0 : index
    %c0_0 = arith.constant 0 : index
    %0 = vector.load %arg1[%c0, %c0_0] : memref<4x512xf32, #tpu.memory_space<vmem>>, vector<4x512xf32>
    %c0_1 = arith.constant 0 : index
    %c0_2 = arith.constant 0 : index
    %1 = vector.load %arg2[%c0_1, %c0_2] : memref<4x1xf32, #tpu.memory_space<vmem>>, vector<4x1xf32>
    %2 = vector.broadcast %1 : vector<4x1xf32> to vector<4x512xf32>
    %3 = arith.mulf %0, %2 : vector<4x512xf32>
    %c0_3 = arith.constant 0 : index
    %c0_4 = arith.constant 0 : index
    %4 = vector.load %arg3[%c0_3, %c0_4] : memref<4x1xf32, #tpu.memory_space<vmem>>, vector<4x1xf32>
    %5 = vector.broadcast %4 : vector<4x1xf32> to vector<4x512xf32>
    %6 = arith.addf %3, %5 : vector<4x512xf32>
    %cst = arith.constant 1.000000e-01 : f32
    %7 = vector.broadcast %cst : f32 to vector<4x512xf32>
    %8 = arith.mulf %7, %6 : vector<4x512xf32>
    %9 = arith.maximumf %6, %8 : vector<4x512xf32>
    %c0_5 = arith.constant 0 : index
    %c0_6 = arith.constant 0 : index
    %10 = vector.load %arg8[%c0_5, %c0_6] : memref<9x512xf32, #tpu.memory_space<vmem>>, vector<9x512xf32>
    %c17_i32 = arith.constant 17 : i32
    %11 = tpu.dynamic_rotate %9 by %c17_i32 dim 1 : vector<4x512xf32>, i32 -> vector<4x512xf32>
    %12 = vector.extract_strided_slice %10 {offsets = [0, 0], sizes = [1, 512], strides = [1, 1]} : vector<9x512xf32> to vector<1x512xf32>
    %13 = vector.broadcast %12 : vector<1x512xf32> to vector<4x512xf32>
    %14 = arith.mulf %11, %13 : vector<4x512xf32>
    %c16_i32 = arith.constant 16 : i32
    %15 = tpu.dynamic_rotate %9 by %c16_i32 dim 1 : vector<4x512xf32>, i32 -> vector<4x512xf32>
    %16 = vector.extract_strided_slice %10 {offsets = [1, 0], sizes = [1, 512], strides = [1, 1]} : vector<9x512xf32> to vector<1x512xf32>
    %17 = vector.broadcast %16 : vector<1x512xf32> to vector<4x512xf32>
    %18 = arith.mulf %15, %17 : vector<4x512xf32>
    %c15_i32 = arith.constant 15 : i32
    %19 = tpu.dynamic_rotate %9 by %c15_i32 dim 1 : vector<4x512xf32>, i32 -> vector<4x512xf32>
    %20 = vector.extract_strided_slice %10 {offsets = [2, 0], sizes = [1, 512], strides = [1, 1]} : vector<9x512xf32> to vector<1x512xf32>
    %21 = vector.broadcast %20 : vector<1x512xf32> to vector<4x512xf32>
    %22 = arith.mulf %19, %21 : vector<4x512xf32>
    %c1_i32 = arith.constant 1 : i32
    %23 = tpu.dynamic_rotate %9 by %c1_i32 dim 1 : vector<4x512xf32>, i32 -> vector<4x512xf32>
    %24 = vector.extract_strided_slice %10 {offsets = [3, 0], sizes = [1, 512], strides = [1, 1]} : vector<9x512xf32> to vector<1x512xf32>
    %25 = vector.broadcast %24 : vector<1x512xf32> to vector<4x512xf32>
    %26 = arith.mulf %23, %25 : vector<4x512xf32>
    %c511_i32 = arith.constant 511 : i32
    %27 = tpu.dynamic_rotate %9 by %c511_i32 dim 1 : vector<4x512xf32>, i32 -> vector<4x512xf32>
    %28 = vector.extract_strided_slice %10 {offsets = [5, 0], sizes = [1, 512], strides = [1, 1]} : vector<9x512xf32> to vector<1x512xf32>
    %29 = vector.broadcast %28 : vector<1x512xf32> to vector<4x512xf32>
    %30 = arith.mulf %27, %29 : vector<4x512xf32>
    %c497_i32 = arith.constant 497 : i32
    %31 = tpu.dynamic_rotate %9 by %c497_i32 dim 1 : vector<4x512xf32>, i32 -> vector<4x512xf32>
    %32 = vector.extract_strided_slice %10 {offsets = [6, 0], sizes = [1, 512], strides = [1, 1]} : vector<9x512xf32> to vector<1x512xf32>
    %33 = vector.broadcast %32 : vector<1x512xf32> to vector<4x512xf32>
    %34 = arith.mulf %31, %33 : vector<4x512xf32>
    %c496_i32 = arith.constant 496 : i32
    %35 = tpu.dynamic_rotate %9 by %c496_i32 dim 1 : vector<4x512xf32>, i32 -> vector<4x512xf32>
    %36 = vector.extract_strided_slice %10 {offsets = [7, 0], sizes = [1, 512], strides = [1, 1]} : vector<9x512xf32> to vector<1x512xf32>
    %37 = vector.broadcast %36 : vector<1x512xf32> to vector<4x512xf32>
    %38 = arith.mulf %35, %37 : vector<4x512xf32>
    %c495_i32 = arith.constant 495 : i32
    %39 = tpu.dynamic_rotate %9 by %c495_i32 dim 1 : vector<4x512xf32>, i32 -> vector<4x512xf32>
    %40 = vector.extract_strided_slice %10 {offsets = [8, 0], sizes = [1, 512], strides = [1, 1]} : vector<9x512xf32> to vector<1x512xf32>
    %41 = vector.broadcast %40 : vector<1x512xf32> to vector<4x512xf32>
    %42 = arith.mulf %39, %41 : vector<4x512xf32>
    %43 = tpu.concatenate %14, %18, %22, %26, %9, %30, %34, %38, %42 in 0 : vector<4x512xf32>, vector<4x512xf32>, vector<4x512xf32>, vector<4x512xf32>, vector<4x512xf32>, vector<4x512xf32>, vector<4x512xf32>, vector<4x512xf32>, vector<4x512xf32> -> vector<36x512xf32>
    %c0_7 = arith.constant 0 : index
    %c0_8 = arith.constant 0 : index
    %44 = vector.load %arg4[%c0_7, %c0_8] : memref<4x36xf32, #tpu.memory_space<vmem>>, vector<4x36xf32>
    %cst_9 = arith.constant dense<0.000000e+00> : vector<4x512xf32>
    %45 = tpu.matmul %44, %43, %cst_9 {dimension_numbers = #tpu.dot_dimension_numbers<[1], [0], [0], [1], [0, 0, 1, 1], [], []>} : vector<4x36xf32>, vector<36x512xf32>, vector<4x512xf32> -> vector<4x512xf32>
    %c0_10 = arith.constant 0 : index
    %c0_11 = arith.constant 0 : index
    %46 = vector.load %arg5[%c0_10, %c0_11] : memref<4x1xf32, #tpu.memory_space<vmem>>, vector<4x1xf32>
    %47 = vector.broadcast %46 : vector<4x1xf32> to vector<4x512xf32>
    %48 = arith.addf %45, %47 : vector<4x512xf32>
    %cst_12 = arith.constant 1.000000e-01 : f32
    %49 = vector.broadcast %cst_12 : f32 to vector<4x512xf32>
    %50 = arith.mulf %49, %48 : vector<4x512xf32>
    %51 = arith.maximumf %48, %50 : vector<4x512xf32>
    %c17_i32_13 = arith.constant 17 : i32
    %52 = tpu.dynamic_rotate %51 by %c17_i32_13 dim 1 : vector<4x512xf32>, i32 -> vector<4x512xf32>
    %53 = vector.extract_strided_slice %10 {offsets = [0, 0], sizes = [1, 512], strides = [1, 1]} : vector<9x512xf32> to vector<1x512xf32>
    %54 = vector.broadcast %53 : vector<1x512xf32> to vector<4x512xf32>
    %55 = arith.mulf %52, %54 : vector<4x512xf32>
    %c16_i32_14 = arith.constant 16 : i32
    %56 = tpu.dynamic_rotate %51 by %c16_i32_14 dim 1 : vector<4x512xf32>, i32 -> vector<4x512xf32>
    %57 = vector.extract_strided_slice %10 {offsets = [1, 0], sizes = [1, 512], strides = [1, 1]} : vector<9x512xf32> to vector<1x512xf32>
    %58 = vector.broadcast %57 : vector<1x512xf32> to vector<4x512xf32>
    %59 = arith.mulf %56, %58 : vector<4x512xf32>
    %c15_i32_15 = arith.constant 15 : i32
    %60 = tpu.dynamic_rotate %51 by %c15_i32_15 dim 1 : vector<4x512xf32>, i32 -> vector<4x512xf32>
    %61 = vector.extract_strided_slice %10 {offsets = [2, 0], sizes = [1, 512], strides = [1, 1]} : vector<9x512xf32> to vector<1x512xf32>
    %62 = vector.broadcast %61 : vector<1x512xf32> to vector<4x512xf32>
    %63 = arith.mulf %60, %62 : vector<4x512xf32>
    %c1_i32_16 = arith.constant 1 : i32
    %64 = tpu.dynamic_rotate %51 by %c1_i32_16 dim 1 : vector<4x512xf32>, i32 -> vector<4x512xf32>
    %65 = vector.extract_strided_slice %10 {offsets = [3, 0], sizes = [1, 512], strides = [1, 1]} : vector<9x512xf32> to vector<1x512xf32>
    %66 = vector.broadcast %65 : vector<1x512xf32> to vector<4x512xf32>
    %67 = arith.mulf %64, %66 : vector<4x512xf32>
    %c511_i32_17 = arith.constant 511 : i32
    %68 = tpu.dynamic_rotate %51 by %c511_i32_17 dim 1 : vector<4x512xf32>, i32 -> vector<4x512xf32>
    %69 = vector.extract_strided_slice %10 {offsets = [5, 0], sizes = [1, 512], strides = [1, 1]} : vector<9x512xf32> to vector<1x512xf32>
    %70 = vector.broadcast %69 : vector<1x512xf32> to vector<4x512xf32>
    %71 = arith.mulf %68, %70 : vector<4x512xf32>
    %c497_i32_18 = arith.constant 497 : i32
    %72 = tpu.dynamic_rotate %51 by %c497_i32_18 dim 1 : vector<4x512xf32>, i32 -> vector<4x512xf32>
    %73 = vector.extract_strided_slice %10 {offsets = [6, 0], sizes = [1, 512], strides = [1, 1]} : vector<9x512xf32> to vector<1x512xf32>
    %74 = vector.broadcast %73 : vector<1x512xf32> to vector<4x512xf32>
    %75 = arith.mulf %72, %74 : vector<4x512xf32>
    %c496_i32_19 = arith.constant 496 : i32
    %76 = tpu.dynamic_rotate %51 by %c496_i32_19 dim 1 : vector<4x512xf32>, i32 -> vector<4x512xf32>
    %77 = vector.extract_strided_slice %10 {offsets = [7, 0], sizes = [1, 512], strides = [1, 1]} : vector<9x512xf32> to vector<1x512xf32>
    %78 = vector.broadcast %77 : vector<1x512xf32> to vector<4x512xf32>
    %79 = arith.mulf %76, %78 : vector<4x512xf32>
    %c495_i32_20 = arith.constant 495 : i32
    %80 = tpu.dynamic_rotate %51 by %c495_i32_20 dim 1 : vector<4x512xf32>, i32 -> vector<4x512xf32>
    %81 = vector.extract_strided_slice %10 {offsets = [8, 0], sizes = [1, 512], strides = [1, 1]} : vector<9x512xf32> to vector<1x512xf32>
    %82 = vector.broadcast %81 : vector<1x512xf32> to vector<4x512xf32>
    %83 = arith.mulf %80, %82 : vector<4x512xf32>
    %84 = tpu.concatenate %55, %59, %63, %67, %51, %71, %75, %79, %83 in 0 : vector<4x512xf32>, vector<4x512xf32>, vector<4x512xf32>, vector<4x512xf32>, vector<4x512xf32>, vector<4x512xf32>, vector<4x512xf32>, vector<4x512xf32>, vector<4x512xf32> -> vector<36x512xf32>
    %c0_21 = arith.constant 0 : index
    %c0_22 = arith.constant 0 : index
    %85 = vector.load %arg6[%c0_21, %c0_22] : memref<4x36xf32, #tpu.memory_space<vmem>>, vector<4x36xf32>
    %cst_23 = arith.constant dense<0.000000e+00> : vector<4x512xf32>
    %86 = tpu.matmul %85, %84, %cst_23 {dimension_numbers = #tpu.dot_dimension_numbers<[1], [0], [0], [1], [0, 0, 1, 1], [], []>} : vector<4x36xf32>, vector<36x512xf32>, vector<4x512xf32> -> vector<4x512xf32>
    %87 = arith.addf %0, %86 : vector<4x512xf32>
    %c0_24 = arith.constant 0 : index
    %c0_25 = arith.constant 0 : index
    %88 = vector.load %arg7[%c0_24, %c0_25] : memref<4x1xf32, #tpu.memory_space<vmem>>, vector<4x1xf32>
    %89 = vector.broadcast %88 : vector<4x1xf32> to vector<4x512xf32>
    %90 = arith.addf %87, %89 : vector<4x512xf32>
    %c0_26 = arith.constant 0 : index
    %c0_27 = arith.constant 0 : index
    %91 = vector.load %arg9[%c0_26, %c0_27] : memref<4x512xf32, #tpu.memory_space<vmem>>, vector<4x512xf32>
    tpu.vector_store %arg9[%c0_26, %c0_27], %90 {strides = array<i32>} : memref<4x512xf32, #tpu.memory_space<vmem>>, vector<4x512xf32>,
    return
  }
  func.func @transform_0(%arg0: i32) -> (i32, i32) {
    %c0_i32 = arith.constant 0 : i32
    %c0_i32_0 = arith.constant 0 : i32
    %c0_i32_1 = arith.constant 0 : i32
    return %c0_i32, %c0_i32_0 : i32, i32
  }
  func.func @transform_1(%arg0: i32) -> (i32, i32) {
    %c0_i32 = arith.constant 0 : i32
    %c0_i32_0 = arith.constant 0 : i32
    %c0_i32_1 = arith.constant 0 : i32
    return %c0_i32, %c0_i32_0 : i32, i32
  }
  func.func @transform_2(%arg0: i32) -> (i32, i32) {
    %c0_i32 = arith.constant 0 : i32
    %c0_i32_0 = arith.constant 0 : i32
    %c0_i32_1 = arith.constant 0 : i32
    return %c0_i32, %c0_i32_0 : i32, i32
  }
  func.func @transform_3(%arg0: i32) -> (i32, i32) {
    %c0_i32 = arith.constant 0 : i32
    %c0_i32_0 = arith.constant 0 : i32
    %c0_i32_1 = arith.constant 0 : i32
    return %c0_i32, %c0_i32_0 : i32, i32
  }
  func.func @transform_4(%arg0: i32) -> (i32, i32) {
    %c0_i32 = arith.constant 0 : i32
    %c0_i32_0 = arith.constant 0 : i32
    %c0_i32_1 = arith.constant 0 : i32
    return %c0_i32, %c0_i32_0 : i32, i32
  }
  func.func @transform_5(%arg0: i32) -> (i32, i32) {
    %c0_i32 = arith.constant 0 : i32
    %c0_i32_0 = arith.constant 0 : i32
    %c0_i32_1 = arith.constant 0 : i32
    return %c0_i32, %c0_i32_0 : i32, i32
  }
  func.func @transform_6(%arg0: i32) -> (i32, i32) {
    %c0_i32 = arith.constant 0 : i32
    %c0_i32_0 = arith.constant 0 : i32
    %c0_i32_1 = arith.constant 0 : i32
    return %c0_i32, %c0_i32_0 : i32, i32
  }
  func.func @transform_7(%arg0: i32) -> (i32, i32) {
    %c0_i32 = arith.constant 0 : i32
    %c0_i32_0 = arith.constant 0 : i32
    %c0_i32_1 = arith.constant 0 : i32
    return %c0_i32, %c0_i32_0 : i32, i32
  }
  func.func @transform_8(%arg0: i32) -> (i32, i32) {
    %c0_i32 = arith.constant 0 : i32
    %c0_i32_0 = arith.constant 0 : i32
    %c0_i32_1 = arith.constant 0 : i32
    return %c0_i32, %c0_i32_0 : i32, i32
  }
}

</mosaic_0001>

<llo_original>
// kernel: tpu_custom_call.1
$region0: #{tpu_custom_call.1}
  #allocation0 [shape = 'u32[]', space=smem, size = 0x4, offset = 0x4, fixed_abs, tag = 'smem constant byte address 0x4 - core index']
  #allocation1 [shape = 'u32[144,128]{1,0:T(1,128)}', space=vmem, size = 0x12000, scoped, tag = 'internal scratch']
  %s0 = inlined_call_operand.vmem [shape: f32[4,512], index: 0, kind: input, shape index: {}]
  %s1 = inlined_call_operand.vmem [shape: f32[4,1], index: 1, kind: input, shape index: {}]
  %s2 = inlined_call_operand.vmem [shape: f32[4,1], index: 2, kind: input, shape index: {}]
  %s3 = inlined_call_operand.vmem [shape: f32[4,36], index: 3, kind: input, shape index: {}]
  %s4 = inlined_call_operand.vmem [shape: f32[4,1], index: 4, kind: input, shape index: {}]
  %s5 = inlined_call_operand.vmem [shape: f32[4,36], index: 5, kind: input, shape index: {}]
  %s6 = inlined_call_operand.vmem [shape: f32[4,1], index: 6, kind: input, shape index: {}]
  %s7 = inlined_call_operand.hbm [shape: f32[9,512], index: 7, kind: input, shape index: {}]
  %s8 = inlined_call_operand.hbm [shape: f32[4,512], index: 8, kind: output, shape index: {}]
  %s9 = sld [smem:[#allocation0]]
  $region46: #{tpu_custom_call.1} parent=0
    _
  %s11 = ssub.s32 1, %s9
  %s12 = scalar_select 0, %s11, %s9
  $region1: #{tpu_custom_call.1} parent=0
    #allocation2 [shape = 'u8[32768]{0}', space=vmem, size = 0x8000, scoped, tag = 'input window, operand 7, single buffered']
    #allocation3 [shape = 's32[1]{0}', space=sflag, size = 0x4, scoped, tag = 'scoped memory for tpu_custom_call.1']
    #allocation4 [shape = 's32[1]{0}', space=sflag, size = 0x4, scoped, tag = 'scoped memory for tpu_custom_call.1']
    #allocation5 [shape = 'u8[8192]{0}', space=vmem, size = 0x2000, scoped, tag = 'output window, operand 0, single buffered']
    %13 = vsyncpa [#allocation3], 0
    %14 = vsyncpa [#allocation4], 0
    // Predicated region
    $region2: #{tpu_custom_call.1} parent=1 // pred_check
      _
    $region3: #{tpu_custom_call.1} parent=1 // pred_check_branch
      %16 = sbr.rel (0) target = $region5
    $region4: #{tpu_custom_call.1} parent=1 // pred_region
      _
    $region5: #{tpu_custom_call.1} parent=1 // pred_fallthru
      _
    // Predicated region
    $region6: #{tpu_custom_call.1} parent=1 // pred_check
      _
    $region7: #{tpu_custom_call.1} parent=1 // pred_check_branch
      %18 = sbr.rel (0) target = $region9
    $region8: #{tpu_custom_call.1} parent=1 // pred_region
      _
    $region9: #{tpu_custom_call.1} parent=1 // pred_fallthru
      _
    // Predicated region
    $region10: #{tpu_custom_call.1} parent=1 // pred_check
      _
    $region11: #{tpu_custom_call.1} parent=1 // pred_check_branch
      %20 = sbr.rel (0) target = $region13
    $region12: #{tpu_custom_call.1} parent=1 // pred_region
      _
    $region13: #{tpu_custom_call.1} parent=1 // pred_fallthru
      _
    // Predicated region
    $region14: #{tpu_custom_call.1} parent=1 // pred_check
      _
    $region15: #{tpu_custom_call.1} parent=1 // pred_check_branch
      %22 = sbr.rel (0) target = $region17
    $region16: #{tpu_custom_call.1} parent=1 // pred_region
      _
    $region17: #{tpu_custom_call.1} parent=1 // pred_fallthru
      _
    // Predicated region
    $region18: #{tpu_custom_call.1} parent=1 // pred_check
      _
    $region19: #{tpu_custom_call.1} parent=1 // pred_check_branch
      %24 = sbr.rel (0) target = $region21
    $region20: #{tpu_custom_call.1} parent=1 // pred_region
      _
    $region21: #{tpu_custom_call.1} parent=1 // pred_fallthru
      _
    // Predicated region
    $region22: #{tpu_custom_call.1} parent=1 // pred_check
      _
    $region23: #{tpu_custom_call.1} parent=1 // pred_check_branch
      %26 = sbr.rel (0) target = $region25
    $region24: #{tpu_custom_call.1} parent=1 // pred_region
      _
    $region25: #{tpu_custom_call.1} parent=1 // pred_fallthru
      _
    // Predicated region
    $region26: #{tpu_custom_call.1} parent=1 // pred_check
      _
    $region27: #{tpu_custom_call.1} parent=1 // pred_check_branch
      %28 = sbr.rel (0) target = $region29
    $region28: #{tpu_custom_call.1} parent=1 // pred_region
      _
    $region29: #{tpu_custom_call.1} parent=1 // pred_fallthru
      _
    // Predicated region
    $region30: #{tpu_custom_call.1} parent=1 // pred_check
      _
    $region31: #{tpu_custom_call.1} parent=1 // pred_check_branch
      %30 = sbr.rel (0) target = $region33
    $region32: #{tpu_custom_call.1} parent=1 // pred_region
      %s32 = ssub.s32 1024, 1024
      %33 = vsyncadd [#allocation3], %s32
      %s34 = sshll.u32 [#allocation2], 4
      %s35 = int_to_ptr.vmem [resolvable:$true] %s34
      %40 = dma.hbm_to_vmem [thread:$0]  %s7, 1024, %s35, [#allocation3], 512, 512, 32
    $region33: #{tpu_custom_call.1} parent=1 // pred_fallthru
      _
    // Predicated region
    $region34: #{tpu_custom_call.1} parent=1 // pred_check
      _
    $region35: #{tpu_custom_call.1} parent=1 // pred_check_branch
      %42 = sbr.rel (0) target = $region37
    $region36: #{tpu_custom_call.1} parent=1 // pred_region
      %43 = dma.done [#allocation3], 1024
    $region37: #{tpu_custom_call.1} parent=1 // pred_fallthru
      _
    %v44 = vld [vmem:[%s0] sm:$0xff]
    %v45 = vld [vmem:[%s0 + $0x8] sm:$0xff]
    %v46 = vld [vmem:[%s1] sm:$0xf]
    %48 = vset.pattern.permute.xlu0 0
    %49 = vperm.xlu0 %48, %v46
    %v50 = vpop.permute.xlu0 %49
    %v52 = vunpack.c.l.s4 839922192
    %v53 = vunpack.c.0.s8 %v52
    %v54 = vlaneseq
    %v55 = vshrl.u32 %v54, 7
    %v56 = vsub.s32 %v53, %v55
    %v57 = vrot.slane %v50, %v56
    %v59 = vmul.f32 %v44, %v57
    %v60 = vmul.f32 %v45, %v57
    %v61 = vld [vmem:[%s2] sm:$0xf]
    %63 = vset.pattern.permute.xlu0 0
    %64 = vperm.xlu0 %63, %v61
    %v65 = vpop.permute.xlu0 %64
    %v67 = vunpack.c.l.s4 839922192
    %v68 = vunpack.c.0.s8 %v67
    %v69 = vlaneseq
    %v70 = vshrl.u32 %v69, 7
    %v71 = vsub.s32 %v68, %v70
    %v72 = vrot.slane %v65, %v71
    %v74 = vadd.f32 %v59, %v72
    %v75 = vadd.f32 %v60, %v72
    %v76 = vmul.f32 %v74, 0.1
    %v77 = vmul.f32 %v75, 0.1
    %v78 = vmax.f32 %v74, %v76
    %v79 = vmax.f32 %v75, %v77
    %v80 = vld [vmem:[#allocation2] sm:$0xff]
    %v81 = vld [vmem:[#allocation2 + $0x8] sm:$0xff]
    %v82 = vld [vmem:[#allocation2 + $0x10] sm:$0xff]
    %v83 = vld [vmem:[#allocation2 + $0x18] sm:$0xff]
    %v84 = vld [vmem:[#allocation2 + $0x20] sm:$0x1]
    %v85 = vld [vmem:[#allocation2 + $0x28] sm:$0x1]
    %v86 = vld [vmem:[#allocation2 + $0x30] sm:$0x1]
    %v87 = vld [vmem:[#allocation2 + $0x38] sm:$0x1]
    %v90 = vcombine.high %v78, %v78
    %v91 = vcombine.high %v79, %v79
    %94 = vrot.lane.b32.xlu0 %v78, 17
    %v95 = vpop.permute.xlu0 %94
    %96 = vrot.lane.b32.xlu0 %v90, 17
    %v97 = vpop.permute.xlu0 %96
    %98 = vrot.lane.b32.xlu0 %v79, 17
    %v99 = vpop.permute.xlu0 %98
    %100 = vrot.lane.b32.xlu0 %v91, 17
    %v101 = vpop.permute.xlu0 %100
    %v102 = vlaneseq
    %v103 = vand.u32 %v102, 127
    %vm104 = vcmp.lt.s32.totalorder %v103, 17
    %v105 = vsel %vm104, %v99, %v101
    %v106 = vsel %vm104, %v97, %v99
    %v107 = vsel %vm104, %v95, %v97
    %v108 = vsel %vm104, %v101, %v95
    %v109 = vlaneseq
    %v110 = vshrl.u32 %v109, 7
    %v111 = vsub.s32 0, %v110
    %v112 = vrot.slane %v80, %v111
    %v113 = vlaneseq
    %v114 = vshrl.u32 %v113, 7
    %v115 = vsub.s32 0, %v114
    %v116 = vrot.slane %v81, %v115
    %v117 = vlaneseq
    %v118 = vshrl.u32 %v117, 7
    %v119 = vsub.s32 0, %v118
    %v120 = vrot.slane %v82, %v119
    %v121 = vlaneseq
    %v122 = vshrl.u32 %v121, 7
    %v123 = vsub.s32 0, %v122
    %v124 = vrot.slane %v83, %v123
    %v125 = vmul.f32 %v108, %v112
    %v126 = vmul.f32 %v107, %v116
    %v127 = vmul.f32 %v106, %v120
    %v128 = vmul.f32 %v105, %v124
    %129 = vrot.lane.b32.xlu0 %v78, 16
    %v130 = vpop.permute.xlu0 %129
    %131 = vrot.lane.b32.xlu0 %v90, 16
    %v132 = vpop.permute.xlu0 %131
    %133 = vrot.lane.b32.xlu0 %v79, 16
    %v134 = vpop.permute.xlu0 %133
    %135 = vrot.lane.b32.xlu0 %v91, 16
    %v136 = vpop.permute.xlu0 %135
    %vm137 = vcmp.lt.s32.totalorder %v103, 16
    %v138 = vsel %vm137, %v134, %v136
    %v139 = vsel %vm137, %v132, %v134
    %v140 = vsel %vm137, %v130, %v132
    %v141 = vsel %vm137, %v136, %v130
    %v142 = vlaneseq
    %v143 = vshrl.u32 %v142, 7
    %v144 = vsub.s32 1, %v143
    %v145 = vrot.slane %v80, %v144
    %v146 = vlaneseq
    %v147 = vshrl.u32 %v146, 7
    %v148 = vsub.s32 1, %v147
    %v149 = vrot.slane %v81, %v148
    %v150 = vlaneseq
    %v151 = vshrl.u32 %v150, 7
    %v152 = vsub.s32 1, %v151
    %v153 = vrot.slane %v82, %v152
    %v154 = vlaneseq
    %v155 = vshrl.u32 %v154, 7
    %v156 = vsub.s32 1, %v155
    %v157 = vrot.slane %v83, %v156
    %v158 = vmul.f32 %v141, %v145
    %v159 = vmul.f32 %v140, %v149
    %v160 = vmul.f32 %v139, %v153
    %v161 = vmul.f32 %v138, %v157
    %162 = vrot.lane.b32.xlu0 %v78, 15
    %v163 = vpop.permute.xlu0 %162
    %164 = vrot.lane.b32.xlu0 %v90, 15
    %v165 = vpop.permute.xlu0 %164
    %166 = vrot.lane.b32.xlu0 %v79, 15
    %v167 = vpop.permute.xlu0 %166
    %168 = vrot.lane.b32.xlu0 %v91, 15
    %v169 = vpop.permute.xlu0 %168
    %vm170 = vcmp.lt.s32.totalorder %v103, 15
    %v171 = vsel %vm170, %v167, %v169
    %v172 = vsel %vm170, %v165, %v167
    %v173 = vsel %vm170, %v163, %v165
    %v174 = vsel %vm170, %v169, %v163
    %v175 = vlaneseq
    %v176 = vshrl.u32 %v175, 7
    %v177 = vsub.s32 2, %v176
    %v178 = vrot.slane %v80, %v177
    %v179 = vlaneseq
    %v180 = vshrl.u32 %v179, 7
    %v181 = vsub.s32 2, %v180
    %v182 = vrot.slane %v81, %v181
    %v183 = vlaneseq
    %v184 = vshrl.u32 %v183, 7
    %v185 = vsub.s32 2, %v184
    %v186 = vrot.slane %v82, %v185
    %v187 = vlaneseq
    %v188 = vshrl.u32 %v187, 7
    %v189 = vsub.s32 2, %v188
    %v190 = vrot.slane %v83, %v189
    %v191 = vmul.f32 %v174, %v178
    %v192 = vmul.f32 %v173, %v182
    %v193 = vmul.f32 %v172, %v186
    %v194 = vmul.f32 %v171, %v190
    %195 = vrot.lane.b32.xlu0 %v78, 1
    %v196 = vpop.permute.xlu0 %195
    %197 = vrot.lane.b32.xlu0 %v90, 1
    %v198 = vpop.permute.xlu0 %197
    %199 = vrot.lane.b32.xlu0 %v79, 1
    %v200 = vpop.permute.xlu0 %199
    %201 = vrot.lane.b32.xlu0 %v91, 1
    %v202 = vpop.permute.xlu0 %201
    %vm203 = vcmp.lt.s32.totalorder %v103, 1
    %v204 = vsel %vm203, %v200, %v202
    %v205 = vsel %vm203, %v198, %v200
    %v206 = vsel %vm203, %v196, %v198
    %v207 = vsel %vm203, %v202, %v196
    %v208 = vlaneseq
    %v209 = vshrl.u32 %v208, 7
    %v210 = vsub.s32 3, %v209
    %v211 = vrot.slane %v80, %v210
    %v212 = vlaneseq
    %v213 = vshrl.u32 %v212, 7
    %v214 = vsub.s32 3, %v213
    %v215 = vrot.slane %v81, %v214
    %v216 = vlaneseq
    %v217 = vshrl.u32 %v216, 7
    %v218 = vsub.s32 3, %v217
    %v219 = vrot.slane %v82, %v218
    %v220 = vlaneseq
    %v221 = vshrl.u32 %v220, 7
    %v222 = vsub.s32 3, %v221
    %v223 = vrot.slane %v83, %v222
    %v224 = vmul.f32 %v207, %v211
    %v225 = vmul.f32 %v206, %v215
    %v226 = vmul.f32 %v205, %v219
    %v227 = vmul.f32 %v204, %v223
    %228 = vrot.lane.b32.xlu0 %v78, 127
    %v229 = vpop.permute.xlu0 %228
    %230 = vrot.lane.b32.xlu0 %v90, 127
    %v231 = vpop.permute.xlu0 %230
    %232 = vrot.lane.b32.xlu0 %v79, 127
    %v233 = vpop.permute.xlu0 %232
    %234 = vrot.lane.b32.xlu0 %v91, 127
    %v235 = vpop.permute.xlu0 %234
    %vm236 = vcmp.lt.s32.totalorder %v103, 127
    %v237 = vsel %vm236, %v233, %v235
    %v238 = vsel %vm236, %v231, %v233
    %v239 = vsel %vm236, %v229, %v231
    %v240 = vsel %vm236, %v235, %v229
    %v241 = vlaneseq
    %v242 = vshrl.u32 %v241, 7
    %v243 = vsub.s32 5, %v242
    %v244 = vrot.slane %v80, %v243
    %v245 = vlaneseq
    %v246 = vshrl.u32 %v245, 7
    %v247 = vsub.s32 5, %v246
    %v248 = vrot.slane %v81, %v247
    %v249 = vlaneseq
    %v250 = vshrl.u32 %v249, 7
    %v251 = vsub.s32 5, %v250
    %v252 = vrot.slane %v82, %v251
    %v253 = vlaneseq
    %v254 = vshrl.u32 %v253, 7
    %v255 = vsub.s32 5, %v254
    %v256 = vrot.slane %v83, %v255
    %v257 = vmul.f32 %v239, %v244
    %v258 = vmul.f32 %v238, %v248
    %v259 = vmul.f32 %v237, %v252
    %v260 = vmul.f32 %v240, %v256
    %261 = vrot.lane.b32.xlu0 %v78, 113
    %v262 = vpop.permute.xlu0 %261
    %263 = vrot.lane.b32.xlu0 %v90, 113
    %v264 = vpop.permute.xlu0 %263
    %265 = vrot.lane.b32.xlu0 %v79, 113
    %v266 = vpop.permute.xlu0 %265
    %267 = vrot.lane.b32.xlu0 %v91, 113
    %v268 = vpop.permute.xlu0 %267
    %vm269 = vcmp.lt.s32.totalorder %v103, 113
    %v270 = vsel %vm269, %v266, %v268
    %v271 = vsel %vm269, %v264, %v266
    %v272 = vsel %vm269, %v262, %v264
    %v273 = vsel %vm269, %v268, %v262
    %v274 = vlaneseq
    %v275 = vshrl.u32 %v274, 7
    %v276 = vsub.s32 6, %v275
    %v277 = vrot.slane %v80, %v276
    %v278 = vlaneseq
    %v279 = vshrl.u32 %v278, 7
    %v280 = vsub.s32 6, %v279
    %v281 = vrot.slane %v81, %v280
    %v282 = vlaneseq
    %v283 = vshrl.u32 %v282, 7
    %v284 = vsub.s32 6, %v283
    %v285 = vrot.slane %v82, %v284
    %v286 = vlaneseq
    %v287 = vshrl.u32 %v286, 7
    %v288 = vsub.s32 6, %v287
    %v289 = vrot.slane %v83, %v288
    %v290 = vmul.f32 %v272, %v277
    %v291 = vmul.f32 %v271, %v281
    %v292 = vmul.f32 %v270, %v285
    %v293 = vmul.f32 %v273, %v289
    %294 = vrot.lane.b32.xlu0 %v78, 112
    %v295 = vpop.permute.xlu0 %294
    %296 = vrot.lane.b32.xlu0 %v90, 112
    %v297 = vpop.permute.xlu0 %296
    %298 = vrot.lane.b32.xlu0 %v79, 112
    %v299 = vpop.permute.xlu0 %298
    %300 = vrot.lane.b32.xlu0 %v91, 112
    %v301 = vpop.permute.xlu0 %300
    %vm302 = vcmp.lt.s32.totalorder %v103, 112
    %v303 = vsel %vm302, %v299, %v301
    %v304 = vsel %vm302, %v297, %v299
    %v305 = vsel %vm302, %v295, %v297
    %v306 = vsel %vm302, %v301, %v295
    %v307 = vlaneseq
    %v308 = vshrl.u32 %v307, 7
    %v309 = vsub.s32 7, %v308
    %v310 = vrot.slane %v80, %v309
    %v311 = vlaneseq
    %v312 = vshrl.u32 %v311, 7
    %v313 = vsub.s32 7, %v312
    %v314 = vrot.slane %v81, %v313
    %v315 = vlaneseq
    %v316 = vshrl.u32 %v315, 7
    %v317 = vsub.s32 7, %v316
    %v318 = vrot.slane %v82, %v317
    %v319 = vlaneseq
    %v320 = vshrl.u32 %v319, 7
    %v321 = vsub.s32 7, %v320
    %v322 = vrot.slane %v83, %v321
    %v323 = vmul.f32 %v305, %v310
    %v324 = vmul.f32 %v304, %v314
    %v325 = vmul.f32 %v303, %v318
    %v326 = vmul.f32 %v306, %v322
    %327 = vrot.lane.b32.xlu0 %v78, 111
    %v328 = vpop.permute.xlu0 %327
    %329 = vrot.lane.b32.xlu0 %v90, 111
    %v330 = vpop.permute.xlu0 %329
    %331 = vrot.lane.b32.xlu0 %v79, 111
    %v332 = vpop.permute.xlu0 %331
    %333 = vrot.lane.b32.xlu0 %v91, 111
    %v334 = vpop.permute.xlu0 %333
    %vm335 = vcmp.lt.s32.totalorder %v103, 111
    %v336 = vsel %vm335, %v332, %v334
    %v337 = vsel %vm335, %v330, %v332
    %v338 = vsel %vm335, %v328, %v330
    %v339 = vsel %vm335, %v334, %v328
    %v340 = vlaneseq
    %v341 = vshrl.u32 %v340, 7
    %v342 = vsub.s32 0, %v341
    %v343 = vrot.slane %v84, %v342
    %v344 = vlaneseq
    %v345 = vshrl.u32 %v344, 7
    %v346 = vsub.s32 0, %v345
    %v347 = vrot.slane %v85, %v346
    %v348 = vlaneseq
    %v349 = vshrl.u32 %v348, 7
    %v350 = vsub.s32 0, %v349
    %v351 = vrot.slane %v86, %v350
    %v352 = vlaneseq
    %v353 = vshrl.u32 %v352, 7
    %v354 = vsub.s32 0, %v353
    %v355 = vrot.slane %v87, %v354
    %v356 = vmul.f32 %v338, %v343
    %v357 = vmul.f32 %v337, %v347
    %v358 = vmul.f32 %v336, %v351
    %v359 = vmul.f32 %v339, %v355
    %v364 = vrot.slane %v158, 4
    %v365 = vrot.slane %v159, 4
    %v366 = vrot.slane %v160, 4
    %v367 = vrot.slane %v161, 4
    %v376 = vrot.slane %v224, 4
    %v377 = vrot.slane %v225, 4
    %v378 = vrot.slane %v226, 4
    %v379 = vrot.slane %v227, 4
    %v388 = vrot.slane %v257, 4
    %v389 = vrot.slane %v258, 4
    %v390 = vrot.slane %v259, 4
    %v391 = vrot.slane %v260, 4
    %v400 = vrot.slane %v323, 4
    %v401 = vrot.slane %v324, 4
    %v402 = vrot.slane %v325, 4
    %v403 = vrot.slane %v326, 4
    %vm408 = vcmask 1043456
    %v409 = vsel %vm408, %v125, %v364
    %v410 = vsel %vm408, %v126, %v365
    %v411 = vsel %vm408, %v127, %v366
    %v412 = vsel %vm408, %v128, %v367
    %v413 = vsel %vm408, %v191, %v376
    %v414 = vsel %vm408, %v192, %v377
    %v415 = vsel %vm408, %v193, %v378
    %v416 = vsel %vm408, %v194, %v379
    %v417 = vsel %vm408, %v78, %v388
    %v418 = vsel %vm408, %v90, %v389
    %v419 = vsel %vm408, %v79, %v390
    %v420 = vsel %vm408, %v91, %v391
    %v421 = vsel %vm408, %v290, %v400
    %v422 = vsel %vm408, %v291, %v401
    %v423 = vsel %vm408, %v292, %v402
    %v424 = vsel %vm408, %v293, %v403
    %v425 = vld [vmem:[%s3] sm:$0xf]
    %v426 = vld [vmem:[%s4] sm:$0xf]
    %428 = vset.pattern.permute.xlu0 0
    %429 = vperm.xlu0 %428, %v426
    %v430 = vpop.permute.xlu0 %429
    %vm432 = vcmask 293888
    %v434 = vsel %vm432, %v425, 0
    %v437 = vsel %vm408, %v356, 0
    %v440 = vsel %vm408, %v357, 0
    %v443 = vsel %vm408, %v358, 0
    %v446 = vsel %vm408, %v359, 0
    %448 = vmatprep.subr.mxu0 0.0
    %449 = vmatpush1.msra.mxu0 0.0
    %450 = vmatprep.subr.mxu0 0.0
    %451 = vmatpush1.msra.mxu0 0.0
    %452 = vmatprep.subr.mxu0 0.0
    %453 = vmatpush1.msra.mxu0 0.0
    %454 = vmatprep.subr.mxu0 0.0
    %455 = vmatpush1.msra.mxu0 0.0
    %456 = vmatprep.subr.mxu0 0.0
    %457 = vmatpush1.msra.mxu0 0.0
    %458 = vmatprep.subr.mxu0 0.0
    %459 = vmatpush1.msra.mxu0 0.0
    %460 = vmatprep.subr.mxu0 0.0
    %461 = vmatpush1.msra.mxu0 0.0
    %462 = vmatprep.subr.mxu0 0.0
    %463 = vmatpush1.msra.mxu0 0.0
    %464 = vmatprep.subr.mxu0 0.0
    %465 = vmatpush1.msra.mxu0 0.0
    %466 = vmatprep.subr.mxu0 0.0
    %467 = vmatpush1.msra.mxu0 0.0
    %468 = vmatprep.subr.mxu0 0.0
    %469 = vmatpush1.msra.mxu0 0.0
    %470 = vmatprep.subr.mxu0 %v440
    %471 = vmatpush1.msra.mxu0 %v437
    %472 = vmatprep.subr.mxu0 %v422
    %473 = vmatpush1.msra.mxu0 %v421
    %474 = vmatprep.subr.mxu0 %v418
    %475 = vmatpush1.msra.mxu0 %v417
    %476 = vmatprep.subr.mxu0 %v414
    %477 = vmatpush1.msra.mxu0 %v413
    %478 = vmatprep.subr.mxu0 %v410
    %479 = vmatpush1.msra.mxu0 %v409
    %480 = vmatprep.subr.mxu0 0.0
    %481 = vmatpush2.msra.mxu0 0.0
    %482 = vmatprep.subr.mxu0 0.0
    %483 = vmatpush2.msra.mxu0 0.0
    %484 = vmatprep.subr.mxu0 0.0
    %485 = vmatpush2.msra.mxu0 0.0
    %486 = vmatprep.subr.mxu0 0.0
    %487 = vmatpush2.msra.mxu0 0.0
    %488 = vmatprep.subr.mxu0 0.0
    %489 = vmatpush2.msra.mxu0 0.0
    %490 = vmatprep.subr.mxu0 0.0
    %491 = vmatpush2.msra.mxu0 0.0
    %492 = vmatprep.subr.mxu0 0.0
    %493 = vmatpush2.msra.mxu0 0.0
    %494 = vmatprep.subr.mxu0 0.0
    %495 = vmatpush2.msra.mxu0 0.0
    %496 = vmatprep.subr.mxu0 0.0
    %497 = vmatpush2.msra.mxu0 0.0
    %498 = vmatprep.subr.mxu0 0.0
    %499 = vmatpush2.msra.mxu0 0.0
    %500 = vmatprep.subr.mxu0 0.0
    %501 = vmatpush2.msra.mxu0 0.0
    %502 = vmatprep.subr.mxu0 0.0
    %503 = vmatpush2.msra.mxu0 0.0
    %504 = vmatprep.subr.mxu0 0.0
    %505 = vmatpush2.msra.mxu0 0.0
    %506 = vmatprep.subr.mxu0 0.0
    %507 = vmatpush2.msra.mxu0 0.0
    %508 = vmatprep.subr.mxu0 0.0
    %509 = vmatpush2.msra.mxu0 0.0
    %510 = vmatprep.subr.mxu0 0.0
    %511 = vmatpush2.msra.mxu0 0.0
    %512 = vmatprep.mubr.f32.mxu0 0.0
    %513 = vmatmul.mubr.f32.gmra.mxu0 %v434
    %v514 = vpop.f32.mrf.mxu0
    %v515 = vadd.f32 %v430, %v514
    %v516 = vpop.f32.mrf.mxu0
    %v517 = vadd.f32 %v430, %v516
    %518 = vdwg.mxu0
    %519 = vmatprep.subr.mxu0 0.0
    %520 = vmatpush1.msra.mxu0 0.0
    %521 = vmatprep.subr.mxu0 0.0
    %522 = vmatpush1.msra.mxu0 0.0
    %523 = vmatprep.subr.mxu0 0.0
    %524 = vmatpush1.msra.mxu0 0.0
    %525 = vmatprep.subr.mxu0 0.0
    %526 = vmatpush1.msra.mxu0 0.0
    %527 = vmatprep.subr.mxu0 0.0
    %528 = vmatpush1.msra.mxu0 0.0
    %529 = vmatprep.subr.mxu0 0.0
    %530 = vmatpush1.msra.mxu0 0.0
    %531 = vmatprep.subr.mxu0 0.0
    %532 = vmatpush1.msra.mxu0 0.0
    %533 = vmatprep.subr.mxu0 0.0
    %534 = vmatpush1.msra.mxu0 0.0
    %535 = vmatprep.subr.mxu0 0.0
    %536 = vmatpush1.msra.mxu0 0.0
    %537 = vmatprep.subr.mxu0 0.0
    %538 = vmatpush1.msra.mxu0 0.0
    %539 = vmatprep.subr.mxu0 0.0
    %540 = vmatpush1.msra.mxu0 0.0
    %541 = vmatprep.subr.mxu0 %v446
    %542 = vmatpush1.msra.mxu0 %v443
    %543 = vmatprep.subr.mxu0 %v424
    %544 = vmatpush1.msra.mxu0 %v423
    %545 = vmatprep.subr.mxu0 %v420
    %546 = vmatpush1.msra.mxu0 %v419
    %547 = vmatprep.subr.mxu0 %v416
    %548 = vmatpush1.msra.mxu0 %v415
    %549 = vmatprep.subr.mxu0 %v412
    %550 = vmatpush1.msra.mxu0 %v411
    %551 = vmatprep.subr.mxu0 0.0
    %552 = vmatpush2.msra.mxu0 0.0
    %553 = vmatprep.subr.mxu0 0.0
    %554 = vmatpush2.msra.mxu0 0.0
    %555 = vmatprep.subr.mxu0 0.0
    %556 = vmatpush2.msra.mxu0 0.0
    %557 = vmatprep.subr.mxu0 0.0
    %558 = vmatpush2.msra.mxu0 0.0
    %559 = vmatprep.subr.mxu0 0.0
    %560 = vmatpush2.msra.mxu0 0.0
    %561 = vmatprep.subr.mxu0 0.0
    %562 = vmatpush2.msra.mxu0 0.0
    %563 = vmatprep.subr.mxu0 0.0
    %564 = vmatpush2.msra.mxu0 0.0
    %565 = vmatprep.subr.mxu0 0.0
    %566 = vmatpush2.msra.mxu0 0.0
    %567 = vmatprep.subr.mxu0 0.0
    %568 = vmatpush2.msra.mxu0 0.0
    %569 = vmatprep.subr.mxu0 0.0
    %570 = vmatpush2.msra.mxu0 0.0
    %571 = vmatprep.subr.mxu0 0.0
    %572 = vmatpush2.msra.mxu0 0.0
    %573 = vmatprep.subr.mxu0 0.0
    %574 = vmatpush2.msra.mxu0 0.0
    %575 = vmatprep.subr.mxu0 0.0
    %576 = vmatpush2.msra.mxu0 0.0
    %577 = vmatprep.subr.mxu0 0.0
    %578 = vmatpush2.msra.mxu0 0.0
    %579 = vmatprep.subr.mxu0 0.0
    %580 = vmatpush2.msra.mxu0 0.0
    %581 = vmatprep.subr.mxu0 0.0
    %582 = vmatpush2.msra.mxu0 0.0
    %583 = vmatprep.mubr.f32.mxu0 0.0
    %584 = vmatmul.mubr.f32.gmra.mxu0 %v434
    %v585 = vpop.f32.mrf.mxu0
    %v586 = vadd.f32 %v430, %v585
    %v587 = vpop.f32.mrf.mxu0
    %v588 = vadd.f32 %v430, %v587
    %589 = vdwg.mxu0
    %v590 = vmul.f32 %v515, 0.1
    %v591 = vmul.f32 %v517, 0.1
    %v592 = vmul.f32 %v586, 0.1
    %v593 = vmul.f32 %v588, 0.1
    %v594 = vmax.f32 %v515, %v590
    %v595 = vmax.f32 %v517, %v591
    %v596 = vmax.f32 %v586, %v592
    %v597 = vmax.f32 %v588, %v593
    %598 = vrot.lane.b32.xlu0 %v594, 17
    %v599 = vpop.permute.xlu0 %598
    %600 = vrot.lane.b32.xlu0 %v595, 17
    %v601 = vpop.permute.xlu0 %600
    %602 = vrot.lane.b32.xlu0 %v596, 17
    %v603 = vpop.permute.xlu0 %602
    %604 = vrot.lane.b32.xlu0 %v597, 17
    %v605 = vpop.permute.xlu0 %604
    %v606 = vsel %vm104, %v603, %v605
    %v607 = vsel %vm104, %v601, %v603
    %v608 = vsel %vm104, %v599, %v601
    %v609 = vsel %vm104, %v605, %v599
    %v610 = vmul.f32 %v609, %v112
    %v611 = vmul.f32 %v608, %v116
    %v612 = vmul.f32 %v607, %v120
    %v613 = vmul.f32 %v606, %v124
    %614 = vrot.lane.b32.xlu0 %v594, 16
    %v615 = vpop.permute.xlu0 %614
    %616 = vrot.lane.b32.xlu0 %v595, 16
    %v617 = vpop.permute.xlu0 %616
    %618 = vrot.lane.b32.xlu0 %v596, 16
    %v619 = vpop.permute.xlu0 %618
    %620 = vrot.lane.b32.xlu0 %v597, 16
    %v621 = vpop.permute.xlu0 %620
    %v622 = vsel %vm137, %v619, %v621
    %v623 = vsel %vm137, %v617, %v619
    %v624 = vsel %vm137, %v615, %v617
    %v625 = vsel %vm137, %v621, %v615
    %v626 = vmul.f32 %v625, %v145
    %v627 = vmul.f32 %v624, %v149
    %v628 = vmul.f32 %v623, %v153
    %v629 = vmul.f32 %v622, %v157
    %630 = vrot.lane.b32.xlu0 %v594, 15
    %v631 = vpop.permute.xlu0 %630
    %632 = vrot.lane.b32.xlu0 %v595, 15
    %v633 = vpop.permute.xlu0 %632
    %634 = vrot.lane.b32.xlu0 %v596, 15
    %v635 = vpop.permute.xlu0 %634
    %636 = vrot.lane.b32.xlu0 %v597, 15
    %v637 = vpop.permute.xlu0 %636
    %v638 = vsel %vm170, %v635, %v637
    %v639 = vsel %vm170, %v633, %v635
    %v640 = vsel %vm170, %v631, %v633
    %v641 = vsel %vm170, %v637, %v631
    %v642 = vmul.f32 %v641, %v178
    %v643 = vmul.f32 %v640, %v182
    %v644 = vmul.f32 %v639, %v186
    %v645 = vmul.f32 %v638, %v190
    %646 = vrot.lane.b32.xlu0 %v594, 1
    %v647 = vpop.permute.xlu0 %646
    %648 = vrot.lane.b32.xlu0 %v595, 1
    %v649 = vpop.permute.xlu0 %648
    %650 = vrot.lane.b32.xlu0 %v596, 1
    %v651 = vpop.permute.xlu0 %650
    %652 = vrot.lane.b32.xlu0 %v597, 1
    %v653 = vpop.permute.xlu0 %652
    %v654 = vsel %vm203, %v651, %v653
    %v655 = vsel %vm203, %v649, %v651
    %v656 = vsel %vm203, %v647, %v649
    %v657 = vsel %vm203, %v653, %v647
    %v658 = vmul.f32 %v657, %v211
    %v659 = vmul.f32 %v656, %v215
    %v660 = vmul.f32 %v655, %v219
    %v661 = vmul.f32 %v654, %v223
    %662 = vrot.lane.b32.xlu0 %v594, 127
    %v663 = vpop.permute.xlu0 %662
    %664 = vrot.lane.b32.xlu0 %v595, 127
    %v665 = vpop.permute.xlu0 %664
    %666 = vrot.lane.b32.xlu0 %v596, 127
    %v667 = vpop.permute.xlu0 %666
    %668 = vrot.lane.b32.xlu0 %v597, 127
    %v669 = vpop.permute.xlu0 %668
    %v670 = vsel %vm236, %v667, %v669
    %v671 = vsel %vm236, %v665, %v667
    %v672 = vsel %vm236, %v663, %v665
    %v673 = vsel %vm236, %v669, %v663
    %v674 = vmul.f32 %v672, %v244
    %v675 = vmul.f32 %v671, %v248
    %v676 = vmul.f32 %v670, %v252
    %v677 = vmul.f32 %v673, %v256
    %678 = vrot.lane.b32.xlu0 %v594, 113
    %v679 = vpop.permute.xlu0 %678
    %680 = vrot.lane.b32.xlu0 %v595, 113
    %v681 = vpop.permute.xlu0 %680
    %682 = vrot.lane.b32.xlu0 %v596, 113
    %v683 = vpop.permute.xlu0 %682
    %684 = vrot.lane.b32.xlu0 %v597, 113
    %v685 = vpop.permute.xlu0 %684
    %v686 = vsel %vm269, %v683, %v685
    %v687 = vsel %vm269, %v681, %v683
    %v688 = vsel %vm269, %v679, %v681
    %v689 = vsel %vm269, %v685, %v679
    %v690 = vmul.f32 %v688, %v277
    %v691 = vmul.f32 %v687, %v281
    %v692 = vmul.f32 %v686, %v285
    %v693 = vmul.f32 %v689, %v289
    %694 = vrot.lane.b32.xlu0 %v594, 112
    %v695 = vpop.permute.xlu0 %694
    %696 = vrot.lane.b32.xlu0 %v595, 112
    %v697 = vpop.permute.xlu0 %696
    %698 = vrot.lane.b32.xlu0 %v596, 112
    %v699 = vpop.permute.xlu0 %698
    %700 = vrot.lane.b32.xlu0 %v597, 112
    %v701 = vpop.permute.xlu0 %700
    %v702 = vsel %vm302, %v699, %v701
    %v703 = vsel %vm302, %v697, %v699
    %v704 = vsel %vm302, %v695, %v697
    %v705 = vsel %vm302, %v701, %v695
    %v706 = vmul.f32 %v704, %v310
    %v707 = vmul.f32 %v703, %v314
    %v708 = vmul.f32 %v702, %v318
    %v709 = vmul.f32 %v705, %v322
    %710 = vrot.lane.b32.xlu0 %v594, 111
    %v711 = vpop.permute.xlu0 %710
    %712 = vrot.lane.b32.xlu0 %v595, 111
    %v713 = vpop.permute.xlu0 %712
    %714 = vrot.lane.b32.xlu0 %v596, 111
    %v715 = vpop.permute.xlu0 %714
    %716 = vrot.lane.b32.xlu0 %v597, 111
    %v717 = vpop.permute.xlu0 %716
    %v718 = vsel %vm335, %v715, %v717
    %v719 = vsel %vm335, %v713, %v715
    %v720 = vsel %vm335, %v711, %v713
    %v721 = vsel %vm335, %v717, %v711
    %v722 = vmul.f32 %v720, %v343
    %v723 = vmul.f32 %v719, %v347
    %v724 = vmul.f32 %v718, %v351
    %v725 = vmul.f32 %v721, %v355
    %v730 = vrot.slane %v626, 4
    %v731 = vrot.slane %v627, 4
    %v732 = vrot.slane %v628, 4
    %v733 = vrot.slane %v629, 4
    %v742 = vrot.slane %v658, 4
    %v743 = vrot.slane %v659, 4
    %v744 = vrot.slane %v660, 4
    %v745 = vrot.slane %v661, 4
    %v754 = vrot.slane %v674, 4
    %v755 = vrot.slane %v675, 4
    %v756 = vrot.slane %v676, 4
    %v757 = vrot.slane %v677, 4
    %v766 = vrot.slane %v706, 4
    %v767 = vrot.slane %v707, 4
    %v768 = vrot.slane %v708, 4
    %v769 = vrot.slane %v709, 4
    %v774 = vsel %vm408, %v610, %v730
    %v775 = vsel %vm408, %v611, %v731
    %v776 = vsel %vm408, %v612, %v732
    %v777 = vsel %vm408, %v613, %v733
    %v778 = vsel %vm408, %v642, %v742
    %v779 = vsel %vm408, %v643, %v743
    %v780 = vsel %vm408, %v644, %v744
    %v781 = vsel %vm408, %v645, %v745
    %v782 = vsel %vm408, %v594, %v754
    %v783 = vsel %vm408, %v595, %v755
    %v784 = vsel %vm408, %v596, %v756
    %v785 = vsel %vm408, %v597, %v757
    %v786 = vsel %vm408, %v690, %v766
    %v787 = vsel %vm408, %v691, %v767
    %v788 = vsel %vm408, %v692, %v768
    %v789 = vsel %vm408, %v693, %v769
    %v790 = vld [vmem:[%s5] sm:$0xf]
    %v792 = vsel %vm432, %v790, 0
    %v795 = vsel %vm408, %v722, 0
    %v798 = vsel %vm408, %v723, 0
    %v801 = vsel %vm408, %v724, 0
    %v804 = vsel %vm408, %v725, 0
    %806 = vmatprep.subr.mxu0 0.0
    %807 = vmatpush1.msra.mxu0 0.0
    %808 = vmatprep.subr.mxu0 0.0
    %809 = vmatpush1.msra.mxu0 0.0
    %810 = vmatprep.subr.mxu0 0.0
    %811 = vmatpush1.msra.mxu0 0.0
    %812 = vmatprep.subr.mxu0 0.0
    %813 = vmatpush1.msra.mxu0 0.0
    %814 = vmatprep.subr.mxu0 0.0
    %815 = vmatpush1.msra.mxu0 0.0
    %816 = vmatprep.subr.mxu0 0.0
    %817 = vmatpush1.msra.mxu0 0.0
    %818 = vmatprep.subr.mxu0 0.0
    %819 = vmatpush1.msra.mxu0 0.0
    %820 = vmatprep.subr.mxu0 0.0
    %821 = vmatpush1.msra.mxu0 0.0
    %822 = vmatprep.subr.mxu0 0.0
    %823 = vmatpush1.msra.mxu0 0.0
    %824 = vmatprep.subr.mxu0 0.0
    %825 = vmatpush1.msra.mxu0 0.0
    %826 = vmatprep.subr.mxu0 0.0
    %827 = vmatpush1.msra.mxu0 0.0
    %828 = vmatprep.subr.mxu0 %v798
    %829 = vmatpush1.msra.mxu0 %v795
    %830 = vmatprep.subr.mxu0 %v787
    %831 = vmatpush1.msra.mxu0 %v786
    %832 = vmatprep.subr.mxu0 %v783
    %833 = vmatpush1.msra.mxu0 %v782
    %834 = vmatprep.subr.mxu0 %v779
    %835 = vmatpush1.msra.mxu0 %v778
    %836 = vmatprep.subr.mxu0 %v775
    %837 = vmatpush1.msra.mxu0 %v774
    %838 = vmatprep.subr.mxu0 0.0
    %839 = vmatpush2.msra.mxu0 0.0
    %840 = vmatprep.subr.mxu0 0.0
    %841 = vmatpush2.msra.mxu0 0.0
    %842 = vmatprep.subr.mxu0 0.0
    %843 = vmatpush2.msra.mxu0 0.0
    %844 = vmatprep.subr.mxu0 0.0
    %845 = vmatpush2.msra.mxu0 0.0
    %846 = vmatprep.subr.mxu0 0.0
    %847 = vmatpush2.msra.mxu0 0.0
    %848 = vmatprep.subr.mxu0 0.0
    %849 = vmatpush2.msra.mxu0 0.0
    %850 = vmatprep.subr.mxu0 0.0
    %851 = vmatpush2.msra.mxu0 0.0
    %852 = vmatprep.subr.mxu0 0.0
    %853 = vmatpush2.msra.mxu0 0.0
    %854 = vmatprep.subr.mxu0 0.0
    %855 = vmatpush2.msra.mxu0 0.0
    %856 = vmatprep.subr.mxu0 0.0
    %857 = vmatpush2.msra.mxu0 0.0
    %858 = vmatprep.subr.mxu0 0.0
    %859 = vmatpush2.msra.mxu0 0.0
    %860 = vmatprep.subr.mxu0 0.0
    %861 = vmatpush2.msra.mxu0 0.0
    %862 = vmatprep.subr.mxu0 0.0
    %863 = vmatpush2.msra.mxu0 0.0
    %864 = vmatprep.subr.mxu0 0.0
    %865 = vmatpush2.msra.mxu0 0.0
    %866 = vmatprep.subr.mxu0 0.0
    %867 = vmatpush2.msra.mxu0 0.0
    %868 = vmatprep.subr.mxu0 0.0
    %869 = vmatpush2.msra.mxu0 0.0
    %870 = vmatprep.mubr.f32.mxu0 0.0
    %871 = vmatmul.mubr.f32.gmra.mxu0 %v792
    %v872 = vpop.f32.mrf.mxu0
    %v873 = vadd.f32 0.0, %v872
    %v874 = vpop.f32.mrf.mxu0
    %v875 = vadd.f32 0.0, %v874
    %876 = vdwg.mxu0
    %877 = vmatprep.subr.mxu0 0.0
    %878 = vmatpush1.msra.mxu0 0.0
    %879 = vmatprep.subr.mxu0 0.0
    %880 = vmatpush1.msra.mxu0 0.0
    %881 = vmatprep.subr.mxu0 0.0
    %882 = vmatpush1.msra.mxu0 0.0
    %883 = vmatprep.subr.mxu0 0.0
    %884 = vmatpush1.msra.mxu0 0.0
    %885 = vmatprep.subr.mxu0 0.0
    %886 = vmatpush1.msra.mxu0 0.0
    %887 = vmatprep.subr.mxu0 0.0
    %888 = vmatpush1.msra.mxu0 0.0
    %889 = vmatprep.subr.mxu0 0.0
    %890 = vmatpush1.msra.mxu0 0.0
    %891 = vmatprep.subr.mxu0 0.0
    %892 = vmatpush1.msra.mxu0 0.0
    %893 = vmatprep.subr.mxu0 0.0
    %894 = vmatpush1.msra.mxu0 0.0
    %895 = vmatprep.subr.mxu0 0.0
    %896 = vmatpush1.msra.mxu0 0.0
    %897 = vmatprep.subr.mxu0 0.0
    %898 = vmatpush1.msra.mxu0 0.0
    %899 = vmatprep.subr.mxu0 %v804
    %900 = vmatpush1.msra.mxu0 %v801
    %901 = vmatprep.subr.mxu0 %v789
    %902 = vmatpush1.msra.mxu0 %v788
    %903 = vmatprep.subr.mxu0 %v785
    %904 = vmatpush1.msra.mxu0 %v784
    %905 = vmatprep.subr.mxu0 %v781
    %906 = vmatpush1.msra.mxu0 %v780
    %907 = vmatprep.subr.mxu0 %v777
    %908 = vmatpush1.msra.mxu0 %v776
    %909 = vmatprep.subr.mxu0 0.0
    %910 = vmatpush2.msra.mxu0 0.0
    %911 = vmatprep.subr.mxu0 0.0
    %912 = vmatpush2.msra.mxu0 0.0
    %913 = vmatprep.subr.mxu0 0.0
    %914 = vmatpush2.msra.mxu0 0.0
    %915 = vmatprep.subr.mxu0 0.0
    %916 = vmatpush2.msra.mxu0 0.0
    %917 = vmatprep.subr.mxu0 0.0
    %918 = vmatpush2.msra.mxu0 0.0
    %919 = vmatprep.subr.mxu0 0.0
    %920 = vmatpush2.msra.mxu0 0.0
    %921 = vmatprep.subr.mxu0 0.0
    %922 = vmatpush2.msra.mxu0 0.0
    %923 = vmatprep.subr.mxu0 0.0
    %924 = vmatpush2.msra.mxu0 0.0
    %925 = vmatprep.subr.mxu0 0.0
    %926 = vmatpush2.msra.mxu0 0.0
    %927 = vmatprep.subr.mxu0 0.0
    %928 = vmatpush2.msra.mxu0 0.0
    %929 = vmatprep.subr.mxu0 0.0
    %930 = vmatpush2.msra.mxu0 0.0
    %931 = vmatprep.subr.mxu0 0.0
    %932 = vmatpush2.msra.mxu0 0.0
    %933 = vmatprep.subr.mxu0 0.0
    %934 = vmatpush2.msra.mxu0 0.0
    %935 = vmatprep.subr.mxu0 0.0
    %936 = vmatpush2.msra.mxu0 0.0
    %937 = vmatprep.subr.mxu0 0.0
    %938 = vmatpush2.msra.mxu0 0.0
    %939 = vmatprep.subr.mxu0 0.0
    %940 = vmatpush2.msra.mxu0 0.0
    %941 = vmatprep.mubr.f32.mxu0 0.0
    %942 = vmatmul.mubr.f32.gmra.mxu0 %v792
    %v943 = vpop.f32.mrf.mxu0
    %v944 = vadd.f32 0.0, %v943
    %v945 = vpop.f32.mrf.mxu0
    %v946 = vadd.f32 0.0, %v945
    %947 = vdwg.mxu0
    %v952 = vcombine.low %v873, %v875
    %v953 = vcombine.low %v944, %v946
    %v956 = vadd.f32 %v44, %v952
    %v957 = vadd.f32 %v45, %v953
    %v958 = vld [vmem:[%s6] sm:$0xf]
    %960 = vset.pattern.permute.xlu0 0
    %961 = vperm.xlu0 %960, %v958
    %v962 = vpop.permute.xlu0 %961
    %v964 = vunpack.c.l.s4 839922192
    %v965 = vunpack.c.0.s8 %v964
    %v966 = vlaneseq
    %v967 = vshrl.u32 %v966, 7
    %v968 = vsub.s32 %v965, %v967
    %v969 = vrot.slane %v962, %v968
    %v971 = vadd.f32 %v956, %v969
    %v972 = vadd.f32 %v957, %v969
    %973 = vst [vmem:[#allocation5] sm:$0xff] %v971
    %974 = vst [vmem:[#allocation5 + $0x8] sm:$0xff] %v972
    // Predicated region
    $region38: #{tpu_custom_call.1} parent=1 // pred_check
      _
    $region39: #{tpu_custom_call.1} parent=1 // pred_check_branch
      %976 = sbr.rel (0) target = $region41
    $region40: #{tpu_custom_call.1} parent=1 // pred_region
      %s978 = ssub.s32 256, 256
      %979 = vsyncadd [#allocation4], %s978
      %s981 = sshll.u32 [#allocation5], 4
      %s982 = int_to_ptr.vmem [resolvable:$true] %s981
      %984 = dma.vmem_to_hbm [thread:$0]  %s982, 256, %s8, [#allocation4]
    $region41: #{tpu_custom_call.1} parent=1 // pred_fallthru
      _
    // Predicated region
    $region42: #{tpu_custom_call.1} parent=1 // pred_check
      _
    $region43: #{tpu_custom_call.1} parent=1 // pred_check_branch
      %986 = sbr.rel (0) target = $region45
    $region44: #{tpu_custom_call.1} parent=1 // pred_region
      %987 = dma.done [#allocation4], 256
    $region45: #{tpu_custom_call.1} parent=1 // pred_fallthru
      _
    %988 = vsyncpa [#allocation3], 1
    %989 = vsyncpa [#allocation4], 1

</llo_original>
